<compile_context>
chip_gen: v7x
topology: tpu7x:2x2x1
jax: 0.10.0
libtpu: 0.0.40
codegen_flags: <defaults>
</compile_context>

<pallas_src>
import functools

import jax
import jax.numpy as jnp
from jax.experimental import pallas as pl
from jax.experimental.pallas import tpu as pltpu


def _round_up(a, m):
    return ((a + m - 1) // m) * m


def _pe_add_dropout_kernel(*refs, flatten, batch, apply_dropout, dropout_p):
    if apply_dropout:
        x_ref, pe_ref, u_ref, o_ref = refs
    else:
        x_ref, pe_ref, o_ref = refs
        u_ref = None

    x = x_ref[...]
    pe = pe_ref[...]                       # [ts, td]
    if flatten:
        rows, td = x.shape                 # rows = ts * batch
        ts = rows // batch
        pe_b = jnp.broadcast_to(pe[:, None, :], (ts, batch, td)).reshape(rows, td)
    else:
        pe_b = pe[:, None, :]              # broadcast over the batch sublane axis
    y = x + pe_b

    if apply_dropout:
        keep = u_ref[...] >= jnp.float32(dropout_p)       # P(keep) = 1 - p
        scale = jnp.float32(1.0 / (1.0 - dropout_p))
        # scale in f32 so bf16 inputs don't pick up a rounded 1/(1-p)
        y = jnp.where(keep, y.astype(jnp.float32) * scale, 0.0)

    o_ref[...] = y.astype(o_ref.dtype)


def learnable_positional_encoding(x, pe, *, dropout_p=0.1, training=False,
                                  rng_key=None, donate_x=False):
    """x: [S, B, D], pe: [max_len, 1, D] -> dropout(x + pe[:S])."""
    S, B, D = x.shape
    max_len = pe.shape[0]
    assert pe.shape == (max_len, 1, D), "pe must be [max_len, 1, d_model]"
    assert S <= max_len, "sequence longer than positional table"

    dropout_p = float(dropout_p)
    apply_dropout = bool(training) and dropout_p > 0.0
    if apply_dropout and not (0.0 < dropout_p < 1.0):
        raise ValueError("dropout_p must be in [0, 1) for training mode")

    pe2 = pe.reshape(max_len, D)            # free: middle dim is 1
    itemsize = jnp.dtype(x.dtype).itemsize
    sub = {1: 32, 2: 16}.get(itemsize, 8)   # dtype-aware sublane quantum
    flatten = (B % sub) != 0                # B on sublanes would waste padding

    u = None
    if apply_dropout:
        if rng_key is None:
            rng_key = jax.random.PRNGKey(0)
        u = jax.random.uniform(rng_key, (S, B, D), dtype=jnp.float32)

    # ---- tile-size selection ------------------------------------------------
    # Per-step bytes = double-buffered (x + out + pe [+ uniforms]); budget
    # leaves headroom for in-kernel temporaries in training mode and stays well
    # under the 32 MiB scoped-VMEM limit on v5e/v6e/v7x.
    budget = (12 if apply_dropout else 16) << 20
    u_bytes = 4 if apply_dropout else 0
    per_s = (2 * B * D + D) * itemsize + B * D * u_bytes
    ts_max = budget // (2 * per_s) if per_s else S

    if S < sub:
        # tiny sequence: single full-extent block (trivially satisfies tiling)
        ts_s, td = S, D
        pe_arr = pe2[:S]
    elif ts_max >= sub or D < 128:
        td = D
        ts_s = max(sub, (min(S, int(ts_max)) // sub) * sub)
        # v7x megacore: keep at least 2 grid steps along S when S allows it
        ts_s = min(ts_s, _round_up(pl.cdiv(S, 2), sub))
        pe_arr = pe2
    else:
        # huge B*D: also tile d_model (multiples of 128) instead of overshooting
        ts_s = sub
        per_sd = (2 * B + 1) * itemsize + B * u_bytes
        td = max(128, (budget // (2 * sub * per_sd) // 128) * 128)
        pe_arr = pe2

    grid = (pl.cdiv(S, ts_s), pl.cdiv(D, td))

    if flatten:
        rows = ts_s * B
        x_in = x.reshape(S * B, D)
        xo_spec = pl.BlockSpec((rows, td), lambda i, j: (i, j))
        out_shape = jax.ShapeDtypeStruct((S * B, D), x.dtype)
        u_in = u.reshape(S * B, D) if apply_dropout else None
    else:
        x_in = x
        xo_spec = pl.BlockSpec((ts_s, B, td), lambda i, j: (i, 0, j))
        out_shape = jax.ShapeDtypeStruct((S, B, D), x.dtype)
        u_in = u
    pe_spec = pl.BlockSpec((ts_s, td), lambda i, j: (i, j))

    inputs = [x_in, pe_arr]
    in_specs = [xo_spec, pe_spec]
    if apply_dropout:
        inputs.append(u_in)
        in_specs.append(xo_spec)

    kernel = functools.partial(
        _pe_add_dropout_kernel,
        flatten=flatten, batch=B,
        apply_dropout=apply_dropout, dropout_p=dropout_p,
    )

    out = pl.pallas_call(
        kernel,
        out_shape=out_shape,
        grid_spec=pltpu.PrefetchScalarGridSpec(
            num_scalar_prefetch=0,
            grid=grid,
            in_specs=in_specs,
            out_specs=xo_spec,
        ),
        compiler_params=pltpu.CompilerParams(
            dimension_semantics=("parallel", "parallel"),
            vmem_limit_bytes=32 << 20,
        ),
        input_output_aliases={0: 0} if donate_x else {},
    )(*inputs)

    return out.reshape(S, B, D) if flatten else out


if __name__ == "__main__":
    key = jax.random.PRNGKey(0)
    k_x, k_pe, k_drop = jax.random.split(key, 3)

    seq_len, batch, d_model, max_len = 8, 2, 32, 1024

    x = jax.random.normal(k_x, (seq_len, batch, d_model), dtype=jnp.float32)
    # nn.init.uniform_(pe, -0.02, 0.02) — deterministic synthetic init
    pe = jax.random.uniform(k_pe, (max_len, 1, d_model), dtype=jnp.float32,
                            minval=-0.02, maxval=0.02)

    # ---- eval mode: dropout is identity, exact reference check --------------
    out = learnable_positional_encoding(x, pe, dropout_p=0.1, training=False)
    out = jax.block_until_ready(out)
    ref = x + pe[:seq_len]
    assert out.shape == (seq_len, batch, d_model)
    assert jnp.allclose(out, ref, atol=1e-6), "eval-mode mismatch vs. reference"

    # ---- training mode: fused dropout, mask from the same jax.random stream -
    p = 0.5
    out_tr = learnable_positional_encoding(x, pe, dropout_p=p, training=True,
                                           rng_key=k_drop)
    out_tr = jax.block_until_ready(out_tr)
    u = jax.random.uniform(k_drop, (seq_len, batch, d_model), dtype=jnp.float32)
    ref_tr = jnp.where(u >= p, (x + pe[:seq_len]) / (1.0 - p), 0.0)
    assert jnp.allclose(out_tr, ref_tr, atol=1e-5), "training-mode mismatch"

    print("KERNEL_OK")
</pallas_src>

<mosaic_0001>
module attributes {stable_mosaic.version = 11 : i64} {
  func.func @_pe_add_dropout_kernel(%arg0: i32, %arg1: i32, %arg2: memref<16x32xf32, #tpu.memory_space<vmem>>, %arg3: memref<8x32xf32, #tpu.memory_space<vmem>>, %arg4: memref<16x32xf32, #tpu.memory_space<vmem>>) attributes {dimension_semantics = [#tpu.dimension_semantics<parallel>, #tpu.dimension_semantics<parallel>], iteration_bounds = array<i64: 1, 1>, scalar_prefetch = 0 : i64, scratch_operands = 0 : i64, tpu.core_type = #tpu.core_type<tc>, window_params = [{transform_indices = @transform_0, window_bounds = array<i64: 16, 32>}, {transform_indices = @transform_1, window_bounds = array<i64: 8, 32>}, {transform_indices = @transform_2, window_bounds = array<i64: 16, 32>}]} {
    %c0 = arith.constant 0 : index
    %c0_0 = arith.constant 0 : index
    %0 = vector.load %arg2[%c0, %c0_0] : memref<16x32xf32, #tpu.memory_space<vmem>>, vector<16x32xf32>
    %c0_1 = arith.constant 0 : index
    %c0_2 = arith.constant 0 : index
    %1 = vector.load %arg3[%c0_1, %c0_2] : memref<8x32xf32, #tpu.memory_space<vmem>>, vector<8x32xf32>
    %2 = vector.shape_cast %1 : vector<8x32xf32> to vector<8x1x32xf32>
    %3 = vector.shape_cast %2 : vector<8x1x32xf32> to vector<8x1x32xf32>
    %4 = vector.broadcast %3 : vector<8x1x32xf32> to vector<8x2x32xf32>
    %5 = vector.shape_cast %4 : vector<8x2x32xf32> to vector<16x32xf32>
    %6 = arith.addf %0, %5 : vector<16x32xf32>
    %c0_3 = arith.constant 0 : index
    %c0_4 = arith.constant 0 : index
    %7 = vector.load %arg4[%c0_3, %c0_4] : memref<16x32xf32, #tpu.memory_space<vmem>>, vector<16x32xf32>
    tpu.vector_store %arg4[%c0_3, %c0_4], %6 {strides = array<i32>} : memref<16x32xf32, #tpu.memory_space<vmem>>, vector<16x32xf32>,
    return
  }
  func.func @transform_0(%arg0: i32, %arg1: i32) -> (i32, i32) {
    %c0_i32 = arith.constant 0 : i32
    return %arg0, %arg1 : i32, i32
  }
  func.func @transform_1(%arg0: i32, %arg1: i32) -> (i32, i32) {
    %c0_i32 = arith.constant 0 : i32
    return %arg0, %arg1 : i32, i32
  }
  func.func @transform_2(%arg0: i32, %arg1: i32) -> (i32, i32) {
    %c0_i32 = arith.constant 0 : i32
    return %arg0, %arg1 : i32, i32
  }
}

</mosaic_0001>

<llo_original>
// kernel: tpu_custom_call.1
$region0: #{tpu_custom_call.1}
  #allocation0 [shape = 'u32[]', space=smem, size = 0x4, offset = 0x4, fixed_abs, tag = 'smem constant byte address 0x4 - core index']
  #allocation1 [shape = 'u32[144,128]{1,0:T(1,128)}', space=vmem, size = 0x12000, scoped, tag = 'internal scratch']
  %s0 = inlined_call_operand.vmem [shape: f32[16,32], index: 0, kind: input, shape index: {}]
  %s1 = inlined_call_operand.vmem [shape: f32[1024,32], index: 1, kind: input, shape index: {}]
  %s2 = inlined_call_operand.hbm [shape: f32[16,32], index: 2, kind: output, shape index: {}]
  %s3 = sld [smem:[#allocation0]]
  $region18: #{tpu_custom_call.1} parent=0
    _
  %s5 = ssub.s32 1, %s3
  %s6 = scalar_select 0, %s5, %s3
  $region1: #{tpu_custom_call.1} parent=0
    #allocation2 [shape = 'u8[8192]{0}', space=vmem, size = 0x2000, scoped, tag = 'output window, operand 0, single buffered']
    #allocation3 [shape = 's32[1]{0}', space=sflag, size = 0x4, scoped, tag = 'scoped memory for tpu_custom_call.1']
    %7 = vsyncpa [#allocation3], 0
    // Predicated region
    $region2: #{tpu_custom_call.1} parent=1 // pred_check
      _
    $region3: #{tpu_custom_call.1} parent=1 // pred_check_branch
      %9 = sbr.rel (0) target = $region5
    $region4: #{tpu_custom_call.1} parent=1 // pred_region
      _
    $region5: #{tpu_custom_call.1} parent=1 // pred_fallthru
      _
    // Predicated region
    $region6: #{tpu_custom_call.1} parent=1 // pred_check
      _
    $region7: #{tpu_custom_call.1} parent=1 // pred_check_branch
      %11 = sbr.rel (0) target = $region9
    $region8: #{tpu_custom_call.1} parent=1 // pred_region
      _
    $region9: #{tpu_custom_call.1} parent=1 // pred_fallthru
      _
    %v12 = vld [vmem:[%s0] sm:$0xff]
    %v13 = vld [vmem:[%s0 + $0x8] sm:$0xff]
    %v14 = vld [vmem:[%s1] sm:$0xff]
    %v16 = vcombine.high %v14, %v14
    %v18 = vunpack.c.l.s4 1966171168
    %v19 = vunpack.c.0.s8 %v18
    %v20 = vlaneseq
    %v21 = vshrl.u32 %v20, 7
    %v22 = vsub.s32 %v19, %v21
    %v23 = vrot.slane %v14, %v22
    %v25 = vunpack.c.l.s4 1966171168
    %v26 = vunpack.c.0.s8 %v25
    %v27 = vlaneseq
    %v28 = vshrl.u32 %v27, 7
    %v29 = vsub.s32 %v26, %v28
    %v30 = vrot.slane %v16, %v29
    %v31 = vcombine.high %v23, %v23
    %v32 = vcombine.high %v30, %v30
    %v34 = vunpack.c.l.s4 1966171168
    %v35 = vunpack.c.0.s8 %v34
    %v36 = vlaneseq
    %v37 = vshrl.u32 %v36, 7
    %v38 = vsub.s32 %v35, %v37
    %v39 = vrot.slane %v23, %v38
    %v41 = vunpack.c.l.s4 1966171168
    %v42 = vunpack.c.0.s8 %v41
    %v43 = vlaneseq
    %v44 = vshrl.u32 %v43, 7
    %v45 = vsub.s32 %v42, %v44
    %v46 = vrot.slane %v30, %v45
    %v48 = vunpack.c.l.s4 1966171168
    %v49 = vunpack.c.0.s8 %v48
    %v50 = vlaneseq
    %v51 = vshrl.u32 %v50, 7
    %v52 = vsub.s32 %v49, %v51
    %v53 = vrot.slane %v31, %v52
    %v55 = vunpack.c.l.s4 1966171168
    %v56 = vunpack.c.0.s8 %v55
    %v57 = vlaneseq
    %v58 = vshrl.u32 %v57, 7
    %v59 = vsub.s32 %v56, %v58
    %v60 = vrot.slane %v32, %v59
    %v61 = vcombine.high %v39, %v39
    %v62 = vcombine.high %v46, %v46
    %v63 = vcombine.high %v53, %v53
    %v64 = vcombine.high %v60, %v60
    %v65 = vlaneseq
    %v66 = vshrl.u32 %v65, 7
    %v67 = vsub.s32 0, %v66
    %v68 = vrot.slane %v39, %v67
    %v69 = vlaneseq
    %v70 = vshrl.u32 %v69, 7
    %v71 = vsub.s32 0, %v70
    %v72 = vrot.slane %v53, %v71
    %v73 = vlaneseq
    %v74 = vshrl.u32 %v73, 7
    %v75 = vsub.s32 0, %v74
    %v76 = vrot.slane %v61, %v75
    %v77 = vlaneseq
    %v78 = vshrl.u32 %v77, 7
    %v79 = vsub.s32 0, %v78
    %v80 = vrot.slane %v63, %v79
    %v81 = vlaneseq
    %v82 = vshrl.u32 %v81, 7
    %v83 = vsub.s32 0, %v82
    %v84 = vrot.slane %v46, %v83
    %v85 = vlaneseq
    %v86 = vshrl.u32 %v85, 7
    %v87 = vsub.s32 0, %v86
    %v88 = vrot.slane %v60, %v87
    %v89 = vlaneseq
    %v90 = vshrl.u32 %v89, 7
    %v91 = vsub.s32 0, %v90
    %v92 = vrot.slane %v62, %v91
    %v93 = vlaneseq
    %v94 = vshrl.u32 %v93, 7
    %v95 = vsub.s32 0, %v94
    %v96 = vrot.slane %v64, %v95
    %v97 = vcombine.low %v68, %v72
    %v98 = vcombine.low %v76, %v80
    %v100 = vunpack.c.l.s4 1983009808
    %v101 = vunpack.c.0.s8 %v100
    %v102 = vlaneseq
    %v103 = vshrl.u32 %v102, 7
    %v104 = vsub.s32 %v101, %v103
    %v105 = vrot.slane %v97, %v104
    %v107 = vunpack.c.l.s4 1983009808
    %v108 = vunpack.c.0.s8 %v107
    %v109 = vlaneseq
    %v110 = vshrl.u32 %v109, 7
    %v111 = vsub.s32 %v108, %v110
    %v112 = vrot.slane %v98, %v111
    %v113 = vcombine.low %v105, %v112
    %v114 = vcombine.low %v84, %v88
    %v115 = vcombine.low %v92, %v96
    %v117 = vunpack.c.l.s4 1983009808
    %v118 = vunpack.c.0.s8 %v117
    %v119 = vlaneseq
    %v120 = vshrl.u32 %v119, 7
    %v121 = vsub.s32 %v118, %v120
    %v122 = vrot.slane %v114, %v121
    %v124 = vunpack.c.l.s4 1983009808
    %v125 = vunpack.c.0.s8 %v124
    %v126 = vlaneseq
    %v127 = vshrl.u32 %v126, 7
    %v128 = vsub.s32 %v125, %v127
    %v129 = vrot.slane %v115, %v128
    %v130 = vcombine.low %v122, %v129
    %v133 = vadd.f32 %v12, %v113
    %v134 = vadd.f32 %v13, %v130
    %vm135 = vcmask 261120
    %136 = vst.msk [vmem:[#allocation2] sm:$0xff] %vm135, %v133
    %137 = vst.msk [vmem:[#allocation2 + $0x8] sm:$0xff] %vm135, %v134
    // Predicated region
    $region10: #{tpu_custom_call.1} parent=1 // pred_check
      _
    $region11: #{tpu_custom_call.1} parent=1 // pred_check_branch
      %139 = sbr.rel (0) target = $region13
    $region12: #{tpu_custom_call.1} parent=1 // pred_region
      %s141 = ssub.s32 256, 256
      %142 = vsyncadd [#allocation3], %s141
      %s143 = sshll.u32 [#allocation2], 4
      %s144 = int_to_ptr.vmem [resolvable:$true] %s143
      %149 = dma.vmem_to_hbm [thread:$0]  %s144, 256, %s2, [#allocation3], 128, 128, 8
    $region13: #{tpu_custom_call.1} parent=1 // pred_fallthru
      _
    // Predicated region
    $region14: #{tpu_custom_call.1} parent=1 // pred_check
      _
    $region15: #{tpu_custom_call.1} parent=1 // pred_check_branch
      %151 = sbr.rel (0) target = $region17
    $region16: #{tpu_custom_call.1} parent=1 // pred_region
      %152 = dma.done [#allocation3], 256
    $region17: #{tpu_custom_call.1} parent=1 // pred_fallthru
      _
    %153 = vsyncpa [#allocation3], 1

</llo_original>
